<compile_context>
chip_gen: v7x
topology: tpu7x:2x2x1
jax: 0.10.0
libtpu: 0.0.40
codegen_flags: <defaults>
</compile_context>

<pallas_src>
import functools

import jax
import jax.numpy as jnp
from jax.experimental import pallas as pl
from jax.experimental.pallas import tpu as pltpu

_LANES = 128
_SUBLANES = 8
_MAX_BLOCK_ROWS = 1024  # 1024x128 f32 = 512 KiB per input per step; ~2 MiB double-buffered


def _smooth_l1_kernel(p_ref, t_ref, sum_ref, cnt_ref, *,
                      block_rows, valid_rows, need_mask):
    # Cast per-tile; for sub-32-bit inputs this is free VPU filler and halves
    # HBM traffic vs. a wrapper-side cast.
    p = p_ref[...].astype(jnp.float32)
    t = t_ref[...].astype(jnp.float32)

    d = p - t
    ad = jnp.abs(d)
    elem = jnp.where(ad < 1.0, 0.5 * d * d, ad - 0.5)
    pos = (t > 0.0).astype(jnp.int32)

    if need_mask:
        # Last grid block overhangs the array; out-of-bounds rows hold garbage.
        row = (pl.program_id(0) * block_rows
               + jax.lax.broadcasted_iota(jnp.int32, (block_rows, _LANES), 0))
        keep = row < valid_rows
        elem = jnp.where(keep, elem, 0.0)
        pos = jnp.where(keep, pos, 0)

    # Reduce (block_rows, 128) -> (8, 128) with pure vreg-wise VPU adds
    # (no XLU work per step). The final cross-lane reduce happens once,
    # outside the kernel, on the tiny per-tile partials.
    k = block_rows // _SUBLANES
    sum_ref[...] = jnp.sum(elem.reshape(k, _SUBLANES, _LANES), axis=0)
    cnt_ref[...] = jnp.sum(pos.reshape(k, _SUBLANES, _LANES), axis=0)


@jax.jit
def smooth_l1_loss(preds, targets):
    assert preds.shape == targets.shape
    total = preds.size

    p = jnp.ravel(preds)    # contiguous reshape: no copy
    t = jnp.ravel(targets)

    # Only pad when the flat length is not a multiple of 8*128 (keeps the common
    # case copy-free). Zero padding is neutral: smooth_l1(0)=0 and (0>0)=False.
    tile = _SUBLANES * _LANES
    if total % tile:
        pad = tile - total % tile
        p = jnp.pad(p, (0, pad))
        t = jnp.pad(t, (0, pad))

    rows = p.size // _LANES          # multiple of 8
    p2 = p.reshape(rows, _LANES)     # contiguous reshape: no copy
    t2 = t.reshape(rows, _LANES)

    block_rows = min(_MAX_BLOCK_ROWS, rows)
    num_tiles = pl.cdiv(rows, block_rows)
    need_mask = (rows % block_rows) != 0

    kernel = functools.partial(
        _smooth_l1_kernel,
        block_rows=block_rows,
        valid_rows=rows,
        need_mask=need_mask,
    )

    part_sum, part_cnt = pl.pallas_call(
        kernel,
        out_shape=(
            jax.ShapeDtypeStruct((num_tiles, _SUBLANES, _LANES), jnp.float32),
            jax.ShapeDtypeStruct((num_tiles, _SUBLANES, _LANES), jnp.int32),
        ),
        grid=(num_tiles,),
        in_specs=[
            pl.BlockSpec((block_rows, _LANES), lambda i: (i, 0)),
            pl.BlockSpec((block_rows, _LANES), lambda i: (i, 0)),
        ],
        out_specs=(
            pl.BlockSpec((None, _SUBLANES, _LANES), lambda i: (i, 0, 0)),
            pl.BlockSpec((None, _SUBLANES, _LANES), lambda i: (i, 0, 0)),
        ),
        compiler_params=pltpu.CompilerParams(
            dimension_semantics=("parallel",),   # lets v7x megacore shard the grid
        ),
    )(p2, t2)

    # Tiny epilogue: pairwise-sum the per-tile partials, then divide.
    # PyTorch divides the float loss by the long positive count; zero positives
    # yields inf/nan exactly like the reference module.
    loc_loss = jnp.sum(part_sum)
    num_pos = jnp.sum(part_cnt)
    return loc_loss / num_pos.astype(jnp.float32)


def _reference(preds, targets):
    d = preds.astype(jnp.float32) - targets.astype(jnp.float32)
    ad = jnp.abs(d)
    elem = jnp.where(ad < 1.0, 0.5 * d * d, ad - 0.5)
    num_pos = jnp.sum(targets > 0).astype(jnp.float32)
    return jnp.sum(elem) / num_pos


if __name__ == "__main__":
    key = jax.random.PRNGKey(0)
    k1, k2 = jax.random.split(key)

    # Small NCHW-shaped regression tensors (e.g. box-regression maps).
    shape = (2, 4, 16, 16)
    preds = jax.random.normal(k1, shape, dtype=jnp.float32)
    # Targets: mix of zeros (ignored positions) and positive values.
    raw = jax.random.normal(k2, shape, dtype=jnp.float32)
    targets = jnp.where(raw > 0.0, raw, jnp.zeros_like(raw))

    loss = smooth_l1_loss(preds, targets)
    loss = jax.block_until_ready(loss)

    ref = _reference(preds, targets)
    assert jnp.allclose(loss, ref, rtol=1e-5, atol=1e-5), (loss, ref)

    print("KERNEL_OK")
</pallas_src>

<mosaic_0001>
module attributes {stable_mosaic.version = 11 : i64} {
  func.func @_smooth_l1_kernel(%arg0: i32, %arg1: memref<16x128xf32, #tpu.memory_space<vmem>>, %arg2: memref<16x128xf32, #tpu.memory_space<vmem>>, %arg3: memref<1x8x128xf32, #tpu.memory_space<vmem>>, %arg4: memref<1x8x128xi32, #tpu.memory_space<vmem>>) attributes {dimension_semantics = [#tpu.dimension_semantics<parallel>], iteration_bounds = array<i64: 1>, scalar_prefetch = 0 : i64, scratch_operands = 0 : i64, tpu.core_type = #tpu.core_type<tc>, window_params = [{transform_indices = @transform_0, window_bounds = array<i64: 16, 128>}, {transform_indices = @transform_1, window_bounds = array<i64: 16, 128>}, {transform_indices = @transform_2, window_bounds = array<i64: 1, 8, 128>}, {transform_indices = @transform_3, window_bounds = array<i64: 1, 8, 128>}]} {
    %c0 = arith.constant 0 : index
    %c0_0 = arith.constant 0 : index
    %0 = vector.load %arg1[%c0, %c0_0] : memref<16x128xf32, #tpu.memory_space<vmem>>, vector<16x128xf32>
    %c0_1 = arith.constant 0 : index
    %c0_2 = arith.constant 0 : index
    %1 = vector.load %arg2[%c0_1, %c0_2] : memref<16x128xf32, #tpu.memory_space<vmem>>, vector<16x128xf32>
    %2 = arith.subf %0, %1 : vector<16x128xf32>
    %3 = math.absf %2 : vector<16x128xf32>
    %cst = arith.constant 1.000000e+00 : f32
    %4 = vector.broadcast %cst : f32 to vector<16x128xf32>
    %5 = arith.cmpf olt, %3, %4 : vector<16x128xf32>
    %cst_3 = arith.constant 5.000000e-01 : f32
    %6 = vector.broadcast %cst_3 : f32 to vector<16x128xf32>
    %7 = arith.mulf %6, %2 : vector<16x128xf32>
    %8 = arith.mulf %7, %2 : vector<16x128xf32>
    %cst_4 = arith.constant 5.000000e-01 : f32
    %9 = vector.broadcast %cst_4 : f32 to vector<16x128xf32>
    %10 = arith.subf %3, %9 : vector<16x128xf32>
    %11 = arith.select %5, %8, %10 : vector<16x128xi1>, vector<16x128xf32>
    %cst_5 = arith.constant 0.000000e+00 : f32
    %12 = vector.broadcast %cst_5 : f32 to vector<16x128xf32>
    %13 = arith.cmpf ogt, %1, %12 : vector<16x128xf32>
    %14 = arith.extui %13 : vector<16x128xi1> to vector<16x128xi32>
    %15 = vector.shape_cast %11 : vector<16x128xf32> to vector<2x8x128xf32>
    %cst_6 = arith.constant dense<0.000000e+00> : vector<8x128xf32>
    %16 = vector.multi_reduction <add>, %15, %cst_6 [0] : vector<2x8x128xf32> to vector<8x128xf32>
    %c0_7 = arith.constant 0 : index
    %c0_8 = arith.constant 0 : index
    %c0_9 = arith.constant 0 : index
    %17 = vector.load %arg3[%c0_7, %c0_8, %c0_9] : memref<1x8x128xf32, #tpu.memory_space<vmem>>, vector<1x8x128xf32>
    %18 = vector.shape_cast %17 : vector<1x8x128xf32> to vector<8x128xf32>
    %19 = vector.shape_cast %16 : vector<8x128xf32> to vector<1x8x128xf32>
    tpu.vector_store %arg3[%c0_7, %c0_8, %c0_9], %19 {strides = array<i32>} : memref<1x8x128xf32, #tpu.memory_space<vmem>>, vector<1x8x128xf32>,
    %20 = vector.shape_cast %14 : vector<16x128xi32> to vector<2x8x128xi32>
    %cst_10 = arith.constant dense<0> : vector<8x128xi32>
    %21 = vector.multi_reduction <add>, %20, %cst_10 [0] : vector<2x8x128xi32> to vector<8x128xi32>
    %c0_11 = arith.constant 0 : index
    %c0_12 = arith.constant 0 : index
    %c0_13 = arith.constant 0 : index
    %22 = vector.load %arg4[%c0_11, %c0_12, %c0_13] : memref<1x8x128xi32, #tpu.memory_space<vmem>>, vector<1x8x128xi32>
    %23 = vector.shape_cast %22 : vector<1x8x128xi32> to vector<8x128xi32>
    %24 = vector.shape_cast %21 : vector<8x128xi32> to vector<1x8x128xi32>
    tpu.vector_store %arg4[%c0_11, %c0_12, %c0_13], %24 {strides = array<i32>} : memref<1x8x128xi32, #tpu.memory_space<vmem>>, vector<1x8x128xi32>,
    return
  }
  func.func @transform_0(%arg0: i32) -> (i32, i32) {
    %c0_i32 = arith.constant 0 : i32
    %c0_i32_0 = arith.constant 0 : i32
    return %arg0, %c0_i32 : i32, i32
  }
  func.func @transform_1(%arg0: i32) -> (i32, i32) {
    %c0_i32 = arith.constant 0 : i32
    %c0_i32_0 = arith.constant 0 : i32
    return %arg0, %c0_i32 : i32, i32
  }
  func.func @transform_2(%arg0: i32) -> (i32, i32, i32) {
    %c0_i32 = arith.constant 0 : i32
    %c0_i32_0 = arith.constant 0 : i32
    %c0_i32_1 = arith.constant 0 : i32
    return %arg0, %c0_i32, %c0_i32_0 : i32, i32, i32
  }
  func.func @transform_3(%arg0: i32) -> (i32, i32, i32) {
    %c0_i32 = arith.constant 0 : i32
    %c0_i32_0 = arith.constant 0 : i32
    %c0_i32_1 = arith.constant 0 : i32
    return %arg0, %c0_i32, %c0_i32_0 : i32, i32, i32
  }
}

</mosaic_0001>

<llo_original>
// kernel: smooth_l1_loss.1
$region0: #{smooth_l1_loss.1}
  #allocation0 [shape = 'u32[]', space=smem, size = 0x4, offset = 0x4, fixed_abs, tag = 'smem constant byte address 0x4 - core index']
  #allocation1 [shape = 'u32[144,128]{1,0:T(1,128)}', space=vmem, size = 0x12000, scoped, tag = 'internal scratch']
  %s0 = inlined_call_operand.vmem [shape: f32[16,128], index: 0, kind: input, shape index: {}]
  %s1 = inlined_call_operand.vmem [shape: f32[16,128], index: 1, kind: input, shape index: {}]
  %s2 = inlined_call_operand.vmem [shape: f32[1,8,128], index: 2, kind: output, shape index: {0}]
  %s3 = inlined_call_operand.vmem [shape: s32[1,8,128], index: 3, kind: output, shape index: {1}]
  %4 = xla_tuple %s2, %s3
  %s5 = sld [smem:[#allocation0]]
  $region26: #{smooth_l1_loss.1} parent=0
    _
  %s7 = ssub.s32 1, %s5
  %s8 = scalar_select 0, %s7, %s5
  // Predicated region
  $region2: #{smooth_l1_loss.1} parent=0 // pred_check
    _
  $region3: #{smooth_l1_loss.1} parent=0 // pred_check_branch
    %10 = sbr.rel (0) target = $region5
  $region4: #{smooth_l1_loss.1} parent=0 // pred_region
    _
  $region5: #{smooth_l1_loss.1} parent=0 // pred_fallthru
    _
  // Predicated region
  $region6: #{smooth_l1_loss.1} parent=0 // pred_check
    _
  $region7: #{smooth_l1_loss.1} parent=0 // pred_check_branch
    %12 = sbr.rel (0) target = $region9
  $region8: #{smooth_l1_loss.1} parent=0 // pred_region
    _
  $region9: #{smooth_l1_loss.1} parent=0 // pred_fallthru
    _
  %v13 = vld [vmem:[%s0] sm:$0xff]
  %v14 = vld [vmem:[%s0 + $0x8] sm:$0xff]
  %v15 = vld [vmem:[%s1] sm:$0xff]
  %v16 = vld [vmem:[%s1 + $0x8] sm:$0xff]
  %v17 = vsub.f32 %v13, %v15
  %v18 = vsub.f32 %v14, %v16
  %v19 = vand.u32 2147483647, %v17
  %v20 = vand.u32 2147483647, %v18
  %vm21 = vcmp.lt.f32.partialorder %v19, 1.0
  %vm22 = vcmp.lt.f32.partialorder %v20, 1.0
  %v23 = vmul.f32 %v17, 0.5
  %v24 = vmul.f32 %v18, 0.5
  %v25 = vmul.f32 %v23, %v17
  %v26 = vmul.f32 %v24, %v18
  %v27 = vsub.f32 %v19, 0.5
  %v28 = vsub.f32 %v20, 0.5
  %v29 = vsel %vm21, %v25, %v27
  %v30 = vsel %vm22, %v26, %v28
  %vm31 = vcmp.gt.f32.partialorder %v15, 0.0
  %vm32 = vcmp.gt.f32.partialorder %v16, 0.0
  %v33 = vsel %vm31, 1, 0
  %v34 = vsel %vm32, 1, 0
  %v35 = vadd.f32 %v29, %v30
  %36 = vst [vmem:[%s2] sm:$0xff] %v35
  %v37 = vadd.s32 %v33, %v34
  %38 = vst [vmem:[%s3] sm:$0xff] %v37
  // Predicated region
  $region10: #{smooth_l1_loss.1} parent=0 // pred_check
    _
  $region11: #{smooth_l1_loss.1} parent=0 // pred_check_branch
    %40 = sbr.rel (0) target = $region13
  $region12: #{smooth_l1_loss.1} parent=0 // pred_region
    _
  $region13: #{smooth_l1_loss.1} parent=0 // pred_fallthru
    _
  // Predicated region
  $region14: #{smooth_l1_loss.1} parent=0 // pred_check
    _
  $region15: #{smooth_l1_loss.1} parent=0 // pred_check_branch
    %42 = sbr.rel (0) target = $region17
  $region16: #{smooth_l1_loss.1} parent=0 // pred_region
    _
  $region17: #{smooth_l1_loss.1} parent=0 // pred_fallthru
    _
  // Predicated region
  $region18: #{smooth_l1_loss.1} parent=0 // pred_check
    _
  $region19: #{smooth_l1_loss.1} parent=0 // pred_check_branch
    %44 = sbr.rel (0) target = $region21
  $region20: #{smooth_l1_loss.1} parent=0 // pred_region
    _
  $region21: #{smooth_l1_loss.1} parent=0 // pred_fallthru
    _
  // Predicated region
  $region22: #{smooth_l1_loss.1} parent=0 // pred_check
    _
  $region23: #{smooth_l1_loss.1} parent=0 // pred_check_branch
    %46 = sbr.rel (0) target = $region25
  $region24: #{smooth_l1_loss.1} parent=0 // pred_region
    _
  $region25: #{smooth_l1_loss.1} parent=0 // pred_fallthru
    _

</llo_original>
